<compile_context>
chip_gen: v7x
topology: tpu7x:2x2x1
jax: 0.10.0
libtpu: 0.0.40
codegen_flags: <defaults>
</compile_context>

<pallas_src>
import functools

import jax
import jax.numpy as jnp
import numpy as np
from jax import lax
from jax.experimental import pallas as pl
from jax.experimental.pallas import tpu as pltpu


def _attention_batch_kernel(x_ref, xyz_ref, wproj_ref, wt_ref, prm_ref,
                            xs_ref, t_ref, stats_ref, *, N, Np, C, C4):
    """One batch element: projections, attention, trans_conv, BN partial sums."""
    f32 = jnp.float32
    bf16 = jnp.bfloat16

    xs = x_ref[...] + xyz_ref[...]                       # (C, Np) f32
    xs_ref[...] = xs                                     # residual / stage-2 input

    # Stacked shared-q/k + v projection: a single MXU pass per batch block.
    wproj = wproj_ref[...].astype(bf16)                  # (C4 + C, C)
    proj = jnp.dot(wproj, xs.astype(bf16), preferred_element_type=f32)
    xk = proj[:C4, :]                                    # (C4, Np) shared q/k feats
    xv = proj[C4:, :] + prm_ref[:, 0:1]                  # (C, Np)  + v_conv bias

    # scores s[i, j] = q_i . k_j -- contract channel dim 0 of both operands
    # (no XLU transpose, one bf16 cast of xk).
    xk_bf = xk.astype(bf16)
    s = lax.dot_general(xk_bf, xk_bf, (((0,), (0,)), ((), ())),
                        preferred_element_type=f32)      # (Np, Np)

    if N != Np:   # static: mask work only exists when there is lane padding
        key_valid = lax.broadcasted_iota(jnp.int32, (1, Np), 1) < N   # key cols
        qry_valid = lax.broadcasted_iota(jnp.int32, (Np, 1), 0) < N   # query rows
        s = jnp.where(key_valid, s, f32(-1e30))

    # softmax over keys (dim=-1); EUP approx reciprocal for the (Np,1) denom.
    # TODO(synk): on v6e/v7x the exp (EUP) is the binding slot of this phase; a
    # bf16 exp path would cut it ~2x -- kept f32 here for cross-generation safety.
    # TODO(synk): for production N>=1024 on v7x (64 MiB VMEM) tile the attention
    # over query blocks (online softmax + second pass for the colsum renorm).
    s = s - jnp.max(s, axis=-1, keepdims=True)
    p = jnp.exp(s)
    p = p * pl.reciprocal(jnp.sum(p, axis=-1, keepdims=True), approx=True)

    # renorm by 1e-9 + column sum over queries (torch dim=1); exact reciprocal:
    # only Np values, and it keeps padded columns (colsum == 0) finite.
    if N != Np:
        p = jnp.where(qry_valid, p, f32(0.0))
    colsum = jnp.sum(p, axis=0, keepdims=True)           # (1, Np)
    p = p * (f32(1.0) / (f32(1e-9) + colsum))

    # x_r = x_v @ attention ; t = trans_conv(x - x_r)
    xr = jnp.dot(xv.astype(bf16), p.astype(bf16), preferred_element_type=f32)
    t = jnp.dot(wt_ref[...].astype(bf16), (xs - xr).astype(bf16),
                preferred_element_type=f32) + prm_ref[:, 1:2]       # (C, Np)
    t_ref[...] = t

    # Per-batch BatchNorm partials (sum, sum-of-squares) over the valid columns.
    if N != Np:
        tm = jnp.where(key_valid, t, f32(0.0))
    else:
        tm = t
    stats_ref[:, 0:1] = jnp.sum(tm, axis=1, keepdims=True)
    stats_ref[:, 1:2] = jnp.sum(tm * tm, axis=1, keepdims=True)


def _bn_apply_kernel(xs_ref, t_ref, ss_ref, out_ref):
    """out = xs + relu(t * scale + shift)  (BN gamma/beta folded into scale/shift)."""
    scale = ss_ref[:, 0:1]
    shift = ss_ref[:, 1:2]
    out_ref[...] = xs_ref[...] + jnp.maximum(t_ref[...] * scale + shift,
                                             jnp.float32(0.0))


def self_attention_layer(x, xyz, wqk, wv, bv, wt, bt, gamma, beta):
    """Forward pass of Self_Attention_Layer. x/xyz follow PyTorch NCW (B, C, N)."""
    B, C, N = x.shape
    C4 = wqk.shape[0]
    Np = ((N + 127) // 128) * 128        # lane-dense point count (no-op if N%128==0)

    if Np != N:
        pad = ((0, 0), (0, 0), (0, Np - N))
        x_p, xyz_p = jnp.pad(x, pad), jnp.pad(xyz, pad)
    else:
        x_p, xyz_p = x, xyz

    wproj = jnp.concatenate([wqk, wv], axis=0)           # (C4 + C, C) stacked proj
    prm = jnp.concatenate([bv, bt], axis=1)              # (C, 2) = [v-bias|t-bias]

    kernel = functools.partial(_attention_batch_kernel, N=N, Np=Np, C=C, C4=C4)

    def act_block():
        return pl.BlockSpec((None, C, Np), lambda b: (b, 0, 0))

    def full(shape):
        return pl.BlockSpec(shape, lambda b: (0,) * len(shape))

    # Per-grid-step VMEM footprint (double-buffered activation blocks, score matrix,
    # projections, weights) with 2x headroom, clamped to the v7x 64 MiB ceiling.
    step_bytes = 4 * (4 * 2 * C * Np            # x, xyz, xs, t blocks (double-buffered)
                      + 2 * Np * Np             # scores + probabilities
                      + 2 * (C4 + C) * Np       # projection + bf16 temporaries
                      + 3 * C * Np              # xv, xr, diff
                      + (C4 + 2 * C + 2) * C)   # weights + params
    vmem_limit = int(min(max(2 * step_bytes, 16 << 20), 64 << 20))

    flops_per_b = 2 * Np * C * (C4 + 2 * C) + 2 * Np * Np * (C4 + C)
    cost = pl.CostEstimate(
        flops=int(B * flops_per_b),
        transcendentals=int(B * Np * Np),
        bytes_accessed=int(4 * (B * 4 * C * Np + (C4 + 2 * C) * C + B * 2 * C)),
    )

    xs, t, stats = pl.pallas_call(
        kernel,
        grid=(B,),
        in_specs=[act_block(), act_block(),
                  full((C4 + C, C)), full((C, C)), full((C, 2))],
        out_specs=(act_block(), act_block(),
                   pl.BlockSpec((None, C, 2), lambda b: (b, 0, 0))),
        out_shape=(jax.ShapeDtypeStruct((B, C, Np), jnp.float32),
                   jax.ShapeDtypeStruct((B, C, Np), jnp.float32),
                   jax.ShapeDtypeStruct((B, C, 2), jnp.float32)),
        compiler_params=pltpu.CompilerParams(
            dimension_semantics=("parallel",),
            vmem_limit_bytes=vmem_limit),
        cost_estimate=cost,
    )(x_p, xyz_p, wproj, wt, prm)

    # Cross-batch BatchNorm1d statistics (training-mode biased variance) from the
    # per-batch partials; fold gamma into a single scale.  O(C) work -> plain XLA.
    tot = jnp.sum(stats, axis=0)                         # (C, 2)
    inv_cnt = jnp.float32(1.0 / (B * N))
    mean = tot[:, 0:1] * inv_cnt
    var = tot[:, 1:2] * inv_cnt - mean * mean
    scale = gamma * lax.rsqrt(var + 1e-5)
    shift = beta - mean * scale
    ss = jnp.concatenate([scale, shift], axis=1)         # (C, 2)

    out = pl.pallas_call(
        _bn_apply_kernel,
        grid=(B,),
        in_specs=[act_block(), act_block(), full((C, 2))],
        out_specs=act_block(),
        out_shape=jax.ShapeDtypeStruct((B, C, Np), jnp.float32),
        compiler_params=pltpu.CompilerParams(
            dimension_semantics=("parallel",),
            vmem_limit_bytes=int(min(max(10 * 4 * C * Np, 8 << 20), 64 << 20))),
    )(xs, t, ss)

    return out[:, :, :N] if Np != N else out


def reference(x, xyz, wqk, wv, bv, wt, bt, gamma, beta):
    """Pure-f32 JAX reference matching the PyTorch module semantics."""
    x = x + xyz
    xq = jnp.einsum('dc,bcn->bnd', wqk, x)
    xk = jnp.einsum('dc,bcn->bdn', wqk, x)
    attn = jnp.einsum('bnd,bdm->bnm', xq, xk)
    attn = jax.nn.softmax(attn, axis=-1)
    attn = attn / (1e-09 + attn.sum(axis=1, keepdims=True))
    xv = jnp.einsum('dc,bcn->bdn', wv, x) + bv[None]
    xr = jnp.einsum('bcn,bnm->bcm', xv, attn)
    t = jnp.einsum('dc,bcn->bdn', wt, x - xr) + bt[None]
    mean = t.mean(axis=(0, 2), keepdims=True)
    var = ((t - mean) ** 2).mean(axis=(0, 2), keepdims=True)
    tn = (t - mean) / jnp.sqrt(var + 1e-5) * gamma[None] + beta[None]
    return x + jnp.maximum(tn, 0.0)


if __name__ == "__main__":
    B, C, N = 2, 32, 16      # batch, channels, num_points
    C4 = C // 4

    key = jax.random.PRNGKey(0)
    ks = jax.random.split(key, 8)
    x   = jax.random.normal(ks[0], (B, C, N), dtype=jnp.float32)
    xyz = jax.random.normal(ks[1], (B, C, N), dtype=jnp.float32)

    # Deterministic synthetic parameter init (shapes from module __init__).
    wqk = jax.random.normal(ks[2], (C4, C), dtype=jnp.float32) * 0.1   # shared q/k weight
    wv  = jax.random.normal(ks[3], (C, C), dtype=jnp.float32) * 0.1    # v_conv weight
    bv  = jax.random.normal(ks[4], (C, 1), dtype=jnp.float32) * 0.1    # v_conv bias
    wt  = jax.random.normal(ks[5], (C, C), dtype=jnp.float32) * 0.1    # trans_conv weight
    bt  = jax.random.normal(ks[6], (C, 1), dtype=jnp.float32) * 0.1    # trans_conv bias
    gamma = jnp.ones((C, 1), dtype=jnp.float32)                        # BN weight (default)
    beta  = jnp.zeros((C, 1), dtype=jnp.float32)                       # BN bias (default)

    out = self_attention_layer(x, xyz, wqk, wv, bv, wt, bt, gamma, beta)
    out = jax.block_until_ready(out)

    ref = reference(x, xyz, wqk, wv, bv, wt, bt, gamma, beta)
    # bf16 MXU operands (f32 accumulation) + approx EUP softmax reciprocal => looser
    # tolerance than a pure-f32 implementation; elementwise/softmax math stays f32.
    np.testing.assert_allclose(np.asarray(out), np.asarray(ref), rtol=3e-2, atol=3e-2)

    print("KERNEL_OK")
</pallas_src>

<mosaic_0001>
module attributes {stable_mosaic.version = 11 : i64} {
  func.func @_attention_batch_kernel(%arg0: i32, %arg1: memref<1x32x128xf32, #tpu.memory_space<vmem>>, %arg2: memref<1x32x128xf32, #tpu.memory_space<vmem>>, %arg3: memref<40x32xf32, #tpu.memory_space<vmem>>, %arg4: memref<32x32xf32, #tpu.memory_space<vmem>>, %arg5: memref<32x2xf32, #tpu.memory_space<vmem>>, %arg6: memref<1x32x128xf32, #tpu.memory_space<vmem>>, %arg7: memref<1x32x128xf32, #tpu.memory_space<vmem>>, %arg8: memref<1x32x2xf32, #tpu.memory_space<vmem>>) attributes {dimension_semantics = [#tpu.dimension_semantics<parallel>], iteration_bounds = array<i64: 2>, scalar_prefetch = 0 : i64, scratch_operands = 0 : i64, tpu.core_type = #tpu.core_type<tc>, window_params = [{transform_indices = @transform_0, window_bounds = array<i64: 1, 32, 128>}, {transform_indices = @transform_1, window_bounds = array<i64: 1, 32, 128>}, {pipeline_mode = #tpu.pipeline_mode<synchronous>, transform_indices = @transform_2, window_bounds = array<i64: 40, 32>}, {pipeline_mode = #tpu.pipeline_mode<synchronous>, transform_indices = @transform_3, window_bounds = array<i64: 32, 32>}, {pipeline_mode = #tpu.pipeline_mode<synchronous>, transform_indices = @transform_4, window_bounds = array<i64: 32, 2>}, {transform_indices = @transform_5, window_bounds = array<i64: 1, 32, 128>}, {transform_indices = @transform_6, window_bounds = array<i64: 1, 32, 128>}, {transform_indices = @transform_7, window_bounds = array<i64: 1, 32, 2>}]} {
    %c0 = arith.constant 0 : index
    %c0_0 = arith.constant 0 : index
    %c0_1 = arith.constant 0 : index
    %0 = vector.load %arg1[%c0, %c0_0, %c0_1] : memref<1x32x128xf32, #tpu.memory_space<vmem>>, vector<1x32x128xf32>
    %1 = vector.shape_cast %0 : vector<1x32x128xf32> to vector<32x128xf32>
    %c0_2 = arith.constant 0 : index
    %c0_3 = arith.constant 0 : index
    %c0_4 = arith.constant 0 : index
    %2 = vector.load %arg2[%c0_2, %c0_3, %c0_4] : memref<1x32x128xf32, #tpu.memory_space<vmem>>, vector<1x32x128xf32>
    %3 = vector.shape_cast %2 : vector<1x32x128xf32> to vector<32x128xf32>
    %4 = arith.addf %1, %3 : vector<32x128xf32>
    %c0_5 = arith.constant 0 : index
    %c0_6 = arith.constant 0 : index
    %c0_7 = arith.constant 0 : index
    %5 = vector.load %arg6[%c0_5, %c0_6, %c0_7] : memref<1x32x128xf32, #tpu.memory_space<vmem>>, vector<1x32x128xf32>
    %6 = vector.shape_cast %5 : vector<1x32x128xf32> to vector<32x128xf32>
    %7 = vector.shape_cast %4 : vector<32x128xf32> to vector<1x32x128xf32>
    tpu.vector_store %arg6[%c0_5, %c0_6, %c0_7], %7 {strides = array<i32>} : memref<1x32x128xf32, #tpu.memory_space<vmem>>, vector<1x32x128xf32>,
    %c0_8 = arith.constant 0 : index
    %c0_9 = arith.constant 0 : index
    %8 = vector.load %arg3[%c0_8, %c0_9] : memref<40x32xf32, #tpu.memory_space<vmem>>, vector<40x32xf32>
    %9 = arith.truncf %8 : vector<40x32xf32> to vector<40x32xbf16>
    %10 = arith.truncf %4 : vector<32x128xf32> to vector<32x128xbf16>
    %cst = arith.constant dense<0.000000e+00> : vector<40x128xf32>
    %11 = tpu.matmul %9, %10, %cst {dimension_numbers = #tpu.dot_dimension_numbers<[1], [0], [0], [1], [0, 0, 1, 1], [], []>} : vector<40x32xbf16>, vector<32x128xbf16>, vector<40x128xf32> -> vector<40x128xf32>
    %12 = vector.extract_strided_slice %11 {offsets = [0, 0], sizes = [8, 128], strides = [1, 1]} : vector<40x128xf32> to vector<8x128xf32>
    %13 = vector.extract_strided_slice %11 {offsets = [8, 0], sizes = [32, 128], strides = [1, 1]} : vector<40x128xf32> to vector<32x128xf32>
    %c0_10 = arith.constant 0 : index
    %c0_11 = arith.constant 0 : index
    %14 = vector.load %arg5[%c0_10, %c0_11] : memref<32x2xf32, #tpu.memory_space<vmem>>, vector<32x1xf32>
    %15 = vector.broadcast %14 : vector<32x1xf32> to vector<32x128xf32>
    %16 = arith.addf %13, %15 : vector<32x128xf32>
    %17 = arith.truncf %12 : vector<8x128xf32> to vector<8x128xbf16>
    %cst_12 = arith.constant dense<0.000000e+00> : vector<128x128xf32>
    %18 = tpu.matmul %17, %17, %cst_12 {dimension_numbers = #tpu.dot_dimension_numbers<[0], [0], [1], [1], [0, 1, 1, 1], [], []>} : vector<8x128xbf16>, vector<8x128xbf16>, vector<128x128xf32> -> vector<128x128xf32>
    %19 = tpu.iota {dimensions = array<i32: 1>} : vector<1x128xi32>
    %c16_i32 = arith.constant 16 : i32
    %20 = vector.broadcast %c16_i32 : i32 to vector<1x128xi32>
    %21 = arith.cmpi slt, %19, %20 : vector<1x128xi32>
    %22 = tpu.iota {dimensions = array<i32: 0>} : vector<128x1xi32>
    %c16_i32_13 = arith.constant 16 : i32
    %23 = vector.broadcast %c16_i32_13 : i32 to vector<128x1xi32>
    %24 = arith.cmpi slt, %22, %23 : vector<128x1xi32>
    %cst_14 = arith.constant -1.000000e+30 : f32
    %25 = vector.shape_cast %21 : vector<1x128xi1> to vector<1x128xi1>
    %26 = vector.broadcast %25 : vector<1x128xi1> to vector<128x128xi1>
    %27 = vector.broadcast %cst_14 : f32 to vector<128x128xf32>
    %28 = arith.select %26, %18, %27 : vector<128x128xi1>, vector<128x128xf32>
    %cst_15 = arith.constant dense<0xFF800000> : vector<128xf32>
    %29 = vector.multi_reduction <maximumf>, %28, %cst_15 [1] : vector<128x128xf32> to vector<128xf32>
    %30 = vector.shape_cast %29 : vector<128xf32> to vector<128x1xf32>
    %31 = vector.broadcast %30 : vector<128x1xf32> to vector<128x128xf32>
    %32 = arith.subf %28, %31 : vector<128x128xf32>
    %33 = math.exp %32 : vector<128x128xf32>
    %cst_16 = arith.constant dense<0.000000e+00> : vector<128xf32>
    %34 = vector.multi_reduction <add>, %33, %cst_16 [1] : vector<128x128xf32> to vector<128xf32>
    %35 = vector.shape_cast %34 : vector<128xf32> to vector<128x1xf32>
    %36 = tpu.reciprocal %35 {approx = true} : vector<128x1xf32> -> vector<128x1xf32>
    %37 = vector.broadcast %36 : vector<128x1xf32> to vector<128x128xf32>
    %38 = arith.mulf %33, %37 : vector<128x128xf32>
    %cst_17 = arith.constant 0.000000e+00 : f32
    %39 = vector.shape_cast %24 : vector<128x1xi1> to vector<128x1xi1>
    %40 = vector.broadcast %39 : vector<128x1xi1> to vector<128x128xi1>
    %41 = vector.broadcast %cst_17 : f32 to vector<128x128xf32>
    %42 = arith.select %40, %38, %41 : vector<128x128xi1>, vector<128x128xf32>
    %cst_18 = arith.constant dense<0.000000e+00> : vector<128xf32>
    %43 = vector.multi_reduction <add>, %42, %cst_18 [0] : vector<128x128xf32> to vector<128xf32>
    %44 = vector.shape_cast %43 : vector<128xf32> to vector<1x128xf32>
    %cst_19 = arith.constant 9.99999971E-10 : f32
    %45 = vector.broadcast %cst_19 : f32 to vector<1x128xf32>
    %46 = arith.addf %45, %44 : vector<1x128xf32>
    %cst_20 = arith.constant 1.000000e+00 : f32
    %47 = vector.broadcast %cst_20 : f32 to vector<1x128xf32>
    %48 = arith.divf %47, %46 : vector<1x128xf32>
    %49 = vector.broadcast %48 : vector<1x128xf32> to vector<128x128xf32>
    %50 = arith.mulf %42, %49 : vector<128x128xf32>
    %51 = arith.truncf %16 : vector<32x128xf32> to vector<32x128xbf16>
    %52 = arith.truncf %50 : vector<128x128xf32> to vector<128x128xbf16>
    %cst_21 = arith.constant dense<0.000000e+00> : vector<32x128xf32>
    %53 = tpu.matmul %51, %52, %cst_21 {dimension_numbers = #tpu.dot_dimension_numbers<[1], [0], [0], [1], [0, 0, 1, 1], [], []>} : vector<32x128xbf16>, vector<128x128xbf16>, vector<32x128xf32> -> vector<32x128xf32>
    %c0_22 = arith.constant 0 : index
    %c0_23 = arith.constant 0 : index
    %54 = vector.load %arg4[%c0_22, %c0_23] : memref<32x32xf32, #tpu.memory_space<vmem>>, vector<32x32xf32>
    %55 = arith.truncf %54 : vector<32x32xf32> to vector<32x32xbf16>
    %56 = arith.subf %4, %53 : vector<32x128xf32>
    %57 = arith.truncf %56 : vector<32x128xf32> to vector<32x128xbf16>
    %cst_24 = arith.constant dense<0.000000e+00> : vector<32x128xf32>
    %58 = tpu.matmul %55, %57, %cst_24 {dimension_numbers = #tpu.dot_dimension_numbers<[1], [0], [0], [1], [0, 0, 1, 1], [], []>} : vector<32x32xbf16>, vector<32x128xbf16>, vector<32x128xf32> -> vector<32x128xf32>
    %c0_25 = arith.constant 0 : index
    %c1 = arith.constant 1 : index
    %59 = vector.load %arg5[%c0_25, %c1] : memref<32x2xf32, #tpu.memory_space<vmem>>, vector<32x1xf32>
    %60 = vector.broadcast %59 : vector<32x1xf32> to vector<32x128xf32>
    %61 = arith.addf %58, %60 : vector<32x128xf32>
    %c0_26 = arith.constant 0 : index
    %c0_27 = arith.constant 0 : index
    %c0_28 = arith.constant 0 : index
    %62 = vector.load %arg7[%c0_26, %c0_27, %c0_28] : memref<1x32x128xf32, #tpu.memory_space<vmem>>, vector<1x32x128xf32>
    %63 = vector.shape_cast %62 : vector<1x32x128xf32> to vector<32x128xf32>
    %64 = vector.shape_cast %61 : vector<32x128xf32> to vector<1x32x128xf32>
    tpu.vector_store %arg7[%c0_26, %c0_27, %c0_28], %64 {strides = array<i32>} : memref<1x32x128xf32, #tpu.memory_space<vmem>>, vector<1x32x128xf32>,
    %cst_29 = arith.constant 0.000000e+00 : f32
    %65 = vector.shape_cast %21 : vector<1x128xi1> to vector<1x128xi1>
    %66 = vector.broadcast %65 : vector<1x128xi1> to vector<32x128xi1>
    %67 = vector.broadcast %cst_29 : f32 to vector<32x128xf32>
    %68 = arith.select %66, %61, %67 : vector<32x128xi1>, vector<32x128xf32>
    %cst_30 = arith.constant dense<0.000000e+00> : vector<32xf32>
    %69 = vector.multi_reduction <add>, %68, %cst_30 [1] : vector<32x128xf32> to vector<32xf32>
    %70 = vector.shape_cast %69 : vector<32xf32> to vector<32x1xf32>
    %c0_31 = arith.constant 0 : index
    %c0_32 = arith.constant 0 : index
    %c0_33 = arith.constant 0 : index
    %71 = vector.load %arg8[%c0_31, %c0_32, %c0_33] : memref<1x32x2xf32, #tpu.memory_space<vmem>>, vector<1x32x1xf32>
    %72 = vector.shape_cast %71 : vector<1x32x1xf32> to vector<32x1xf32>
    %73 = vector.shape_cast %70 : vector<32x1xf32> to vector<1x32x1xf32>
    tpu.vector_store %arg8[%c0_31, %c0_32, %c0_33], %73 {strides = array<i32>} : memref<1x32x2xf32, #tpu.memory_space<vmem>>, vector<1x32x1xf32>,
    %74 = arith.mulf %68, %68 : vector<32x128xf32>
    %cst_34 = arith.constant dense<0.000000e+00> : vector<32xf32>
    %75 = vector.multi_reduction <add>, %74, %cst_34 [1] : vector<32x128xf32> to vector<32xf32>
    %76 = vector.shape_cast %75 : vector<32xf32> to vector<32x1xf32>
    %c0_35 = arith.constant 0 : index
    %c0_36 = arith.constant 0 : index
    %c1_37 = arith.constant 1 : index
    %77 = vector.load %arg8[%c0_35, %c0_36, %c1_37] : memref<1x32x2xf32, #tpu.memory_space<vmem>>, vector<1x32x1xf32>
    %78 = vector.shape_cast %77 : vector<1x32x1xf32> to vector<32x1xf32>
    %79 = vector.shape_cast %76 : vector<32x1xf32> to vector<1x32x1xf32>
    tpu.vector_store %arg8[%c0_35, %c0_36, %c1_37], %79 {strides = array<i32>} : memref<1x32x2xf32, #tpu.memory_space<vmem>>, vector<1x32x1xf32>,
    return
  }
  func.func @transform_0(%arg0: i32) -> (i32, i32, i32) {
    %c0_i32 = arith.constant 0 : i32
    %c0_i32_0 = arith.constant 0 : i32
    %c0_i32_1 = arith.constant 0 : i32
    return %arg0, %c0_i32, %c0_i32_0 : i32, i32, i32
  }
  func.func @transform_1(%arg0: i32) -> (i32, i32, i32) {
    %c0_i32 = arith.constant 0 : i32
    %c0_i32_0 = arith.constant 0 : i32
    %c0_i32_1 = arith.constant 0 : i32
    return %arg0, %c0_i32, %c0_i32_0 : i32, i32, i32
  }
  func.func @transform_2(%arg0: i32) -> (i32, i32) {
    %c0_i32 = arith.constant 0 : i32
    %c0_i32_0 = arith.constant 0 : i32
    %c0_i32_1 = arith.constant 0 : i32
    return %c0_i32, %c0_i32_0 : i32, i32
  }
  func.func @transform_3(%arg0: i32) -> (i32, i32) {
    %c0_i32 = arith.constant 0 : i32
    %c0_i32_0 = arith.constant 0 : i32
    %c0_i32_1 = arith.constant 0 : i32
    return %c0_i32, %c0_i32_0 : i32, i32
  }
  func.func @transform_4(%arg0: i32) -> (i32, i32) {
    %c0_i32 = arith.constant 0 : i32
    %c0_i32_0 = arith.constant 0 : i32
    %c0_i32_1 = arith.constant 0 : i32
    return %c0_i32, %c0_i32_0 : i32, i32
  }
  func.func @transform_5(%arg0: i32) -> (i32, i32, i32) {
    %c0_i32 = arith.constant 0 : i32
    %c0_i32_0 = arith.constant 0 : i32
    %c0_i32_1 = arith.constant 0 : i32
    return %arg0, %c0_i32, %c0_i32_0 : i32, i32, i32
  }
  func.func @transform_6(%arg0: i32) -> (i32, i32, i32) {
    %c0_i32 = arith.constant 0 : i32
    %c0_i32_0 = arith.constant 0 : i32
    %c0_i32_1 = arith.constant 0 : i32
    return %arg0, %c0_i32, %c0_i32_0 : i32, i32, i32
  }
  func.func @transform_7(%arg0: i32) -> (i32, i32, i32) {
    %c0_i32 = arith.constant 0 : i32
    %c0_i32_0 = arith.constant 0 : i32
    %c0_i32_1 = arith.constant 0 : i32
    return %arg0, %c0_i32, %c0_i32_0 : i32, i32, i32
  }
}

</mosaic_0001>

<llo_original>
// kernel: tpu_custom_call.1
$region0: #{tpu_custom_call.1}
  #allocation0 [shape = 'u32[]', space=smem, size = 0x4, offset = 0x4, fixed_abs, tag = 'smem constant byte address 0x4 - core index']
  #allocation1 [shape = 'u32[144,128]{1,0:T(1,128)}', space=vmem, size = 0x12000, scoped, tag = 'internal scratch']
  %s0 = inlined_call_operand.vmem [shape: f32[2,32,128], index: 0, kind: input, shape index: {}]
  %s1 = inlined_call_operand.hbm [shape: f32[2,32,128], index: 1, kind: input, shape index: {}]
  %s2 = inlined_call_operand.vmem [shape: f32[40,32], index: 2, kind: input, shape index: {}]
  %s3 = inlined_call_operand.hbm [shape: f32[32,32], index: 3, kind: input, shape index: {}]
  %s4 = inlined_call_operand.vmem [shape: f32[32,2], index: 4, kind: input, shape index: {}]
  %s5 = inlined_call_operand.hbm [shape: f32[2,32,128], index: 5, kind: output, shape index: {0}]
  %s6 = inlined_call_operand.hbm [shape: f32[2,32,128], index: 6, kind: output, shape index: {1}]
  %s7 = inlined_call_operand.vmem [shape: f32[2,32,2], index: 7, kind: output, shape index: {2}]
  %8 = xla_tuple %s5, %s6, %s7
  %s9 = sld [smem:[#allocation0]]
  $region77: #{tpu_custom_call.1} parent=0
    _
  %s11 = ssub.s32 1, %s9
  %s12 = scalar_select 0, %s11, %s9
  $region1: #{tpu_custom_call.1} parent=0
    #allocation2 [shape = 'u8[32768]{0}', space=vmem, size = 0x8000, scoped, tag = 'input window, operand 1']
    #allocation3 [shape = 's32[2]{0}', space=sflag, size = 0x8, scoped, tag = 'scoped memory for tpu_custom_call.1']
    #allocation4 [shape = 's32[2]{0}', space=sflag, size = 0x8, scoped, tag = 'scoped memory for tpu_custom_call.1']
    #allocation5 [shape = 'u8[16384]{0}', space=vmem, size = 0x4000, scoped, tag = 'input window, operand 3, single buffered']
    #allocation6 [shape = 's32[1]{0}', space=sflag, size = 0x4, scoped, tag = 'scoped memory for tpu_custom_call.1']
    #allocation7 [shape = 'u8[32768]{0}', space=vmem, size = 0x8000, scoped, tag = 'output window, operand 0']
    #allocation8 [shape = 'u8[32768]{0}', space=vmem, size = 0x8000, scoped, tag = 'output window, operand 1']
    #allocation9 [shape = 's32[2]{0}', space=sflag, size = 0x8, scoped, tag = 'scoped memory for tpu_custom_call.1']
    %13 = vsyncpa [#allocation3], 0
    %s14 = scalar_lea.sflag [#allocation3], 1
    %15 = vsyncpa %s14, 0
    %16 = vsyncpa [#allocation6], 0
    %17 = vsyncpa [#allocation4], 0
    %s18 = scalar_lea.sflag [#allocation4], 1
    %19 = vsyncpa %s18, 0
    %20 = vsyncpa [#allocation9], 0
    %s21 = scalar_lea.sflag [#allocation9], 1
    %22 = vsyncpa %s21, 0
    loop: start=0, step=1, limit=4
    $region2: #{tpu_custom_call.1} parent=1 // loop_pre_header
      _
    $region3: #{tpu_custom_call.1} parent=1 // loop_header
      %s24 = sphi 0, %s28
      %p25 = scmp.ge.s32.totalorder %s24, 4
      %s34 = sphi 0, %s36
      %s37 = sphi 0, %s34
      %s38 = sphi 0, %s37
      %s54 = sphi 0, %s38
      %s60 = sphi 0, %s62
      %s63 = sphi 0, %s60
      %s64 = sphi 0, %s63
      %s80 = sphi 0, %s64
      %s84 = sphi 0, %s84
      %s86 = sphi 0, %s84
      %s87 = sphi 0, %s86
      %s101 = sphi 0, %s87
      %s105 = sphi 0, %s105
      %s107 = sphi 0, %s105
      %s108 = sphi 0, %s107
      %s122 = sphi 0, %s108
      %s126 = sphi 0, %s126
      %s128 = sphi 0, %s126
      %s129 = sphi 0, %s128
      %s143 = sphi 0, %s129
      %s149 = sphi 0, %s151
      %s152 = sphi 0, %s149
      %s153 = sphi 0, %s152
      %s169 = sphi 0, %s153
      %s175 = sphi 0, %s177
      %s178 = sphi 0, %s175
      %s179 = sphi 0, %s178
      %s195 = sphi 0, %s179
      %s201 = sphi 0, %s203
      %s204 = sphi 0, %s201
      %s205 = sphi 0, %s204
      %s221 = sphi 0, %s205
    $region4: #{tpu_custom_call.1} parent=1 // loop_header_branch
      %27 = sbr.rel (%p25) target = $region8
    $region5: #{tpu_custom_call.1} parent=1 // loop_body
      %s29 = ssub.s32 %s24, 1
      %s30 = ssub.s32 %s24, 2
      %s31 = sadd.s32 %s24, 1
      %s32 = ssub.s32 %s24, %s31
      %p33 = scmp.eq.s32.totalorder %s32, 0
      %s35 = sadd.s32 %s34, 1
      %s36 = scalar_select %p33, %s34, %s35
      %p39 = pneg %p33
      %p40 = scmp.eq.s32.totalorder %s24, 1
      %p41 = por %p39, %p40
      %p42 = scmp.ne.s32.totalorder %s34, %s37
      %p43 = scmp.eq.s32.totalorder %s24, 0
      %p44 = por %p42, %p43
      %p45 = scmp.ne.s32.totalorder %s34, %s37
      %p46 = scmp.eq.s32.totalorder %s29, 1
      %p47 = por %p45, %p46
      %p48 = scmp.ne.s32.totalorder %s37, %s38
      %p49 = scmp.eq.s32.totalorder %s29, 0
      %p50 = por %p48, %p49
      %p51 = scmp.ne.s32.totalorder %s37, %s38
      %p52 = scmp.eq.s32.totalorder %s30, 1
      %p53 = por %p51, %p52
      %p55 = scmp.ne.s32.totalorder %s38, %s54
      %p56 = scmp.eq.s32.totalorder %s30, 0
      %p57 = por %p55, %p56
      %s58 = ssub.s32 %s24, %s31
      %p59 = scmp.eq.s32.totalorder %s58, 0
      %s61 = sadd.s32 %s60, 1
      %s62 = scalar_select %p59, %s60, %s61
      %p65 = pneg %p59
      %p66 = scmp.eq.s32.totalorder %s24, 1
      %p67 = por %p65, %p66
      %p68 = scmp.ne.s32.totalorder %s60, %s63
      %p69 = scmp.eq.s32.totalorder %s24, 0
      %p70 = por %p68, %p69
      %p71 = scmp.ne.s32.totalorder %s60, %s63
      %p72 = scmp.eq.s32.totalorder %s29, 1
      %p73 = por %p71, %p72
      %p74 = scmp.ne.s32.totalorder %s63, %s64
      %p75 = scmp.eq.s32.totalorder %s29, 0
      %p76 = por %p74, %p75
      %p77 = scmp.ne.s32.totalorder %s63, %s64
      %p78 = scmp.eq.s32.totalorder %s30, 1
      %p79 = por %p77, %p78
      %p81 = scmp.ne.s32.totalorder %s64, %s80
      %p82 = scmp.eq.s32.totalorder %s30, 0
      %p83 = por %p81, %p82
      %s85 = sadd.s32 %s84, 1
      %p88 = scmp.eq.s32.totalorder %s24, 1
      %p89 = scmp.ne.s32.totalorder %s84, %s86
      %p90 = scmp.eq.s32.totalorder %s24, 0
      %p91 = por %p89, %p90
      %p92 = scmp.ne.s32.totalorder %s84, %s86
      %p93 = scmp.eq.s32.totalorder %s29, 1
      %p94 = por %p92, %p93
      %p95 = scmp.ne.s32.totalorder %s86, %s87
      %p96 = scmp.eq.s32.totalorder %s29, 0
      %p97 = por %p95, %p96
      %p98 = scmp.ne.s32.totalorder %s86, %s87
      %p99 = scmp.eq.s32.totalorder %s30, 1
      %p100 = por %p98, %p99
      %p102 = scmp.ne.s32.totalorder %s87, %s101
      %p103 = scmp.eq.s32.totalorder %s30, 0
      %p104 = por %p102, %p103
      %s106 = sadd.s32 %s105, 1
      %p109 = scmp.eq.s32.totalorder %s24, 1
      %p110 = scmp.ne.s32.totalorder %s105, %s107
      %p111 = scmp.eq.s32.totalorder %s24, 0
      %p112 = por %p110, %p111
      %p113 = scmp.ne.s32.totalorder %s105, %s107
      %p114 = scmp.eq.s32.totalorder %s29, 1
      %p115 = por %p113, %p114
      %p116 = scmp.ne.s32.totalorder %s107, %s108
      %p117 = scmp.eq.s32.totalorder %s29, 0
      %p118 = por %p116, %p117
      %p119 = scmp.ne.s32.totalorder %s107, %s108
      %p120 = scmp.eq.s32.totalorder %s30, 1
      %p121 = por %p119, %p120
      %p123 = scmp.ne.s32.totalorder %s108, %s122
      %p124 = scmp.eq.s32.totalorder %s30, 0
      %p125 = por %p123, %p124
      %s127 = sadd.s32 %s126, 1
      %p130 = scmp.eq.s32.totalorder %s24, 1
      %p131 = scmp.ne.s32.totalorder %s126, %s128
      %p132 = scmp.eq.s32.totalorder %s24, 0
      %p133 = por %p131, %p132
      %p134 = scmp.ne.s32.totalorder %s126, %s128
      %p135 = scmp.eq.s32.totalorder %s29, 1
      %p136 = por %p134, %p135
      %p137 = scmp.ne.s32.totalorder %s128, %s129
      %p138 = scmp.eq.s32.totalorder %s29, 0
      %p139 = por %p137, %p138
      %p140 = scmp.ne.s32.totalorder %s128, %s129
      %p141 = scmp.eq.s32.totalorder %s30, 1
      %p142 = por %p140, %p141
      %p144 = scmp.ne.s32.totalorder %s129, %s143
      %p145 = scmp.eq.s32.totalorder %s30, 0
      %p146 = por %p144, %p145
      %s147 = ssub.s32 %s24, %s31
      %p148 = scmp.eq.s32.totalorder %s147, 0
      %s150 = sadd.s32 %s149, 1
      %s151 = scalar_select %p148, %s149, %s150
      %p154 = pneg %p148
      %p155 = scmp.eq.s32.totalorder %s24, 1
      %p156 = por %p154, %p155
      %p157 = scmp.ne.s32.totalorder %s149, %s152
      %p158 = scmp.eq.s32.totalorder %s24, 0
      %p159 = por %p157, %p158
      %p160 = scmp.ne.s32.totalorder %s149, %s152
      %p161 = scmp.eq.s32.totalorder %s29, 1
      %p162 = por %p160, %p161
      %p163 = scmp.ne.s32.totalorder %s152, %s153
      %p164 = scmp.eq.s32.totalorder %s29, 0
      %p165 = por %p163, %p164
      %p166 = scmp.ne.s32.totalorder %s152, %s153
      %p167 = scmp.eq.s32.totalorder %s30, 1
      %p168 = por %p166, %p167
      %p170 = scmp.ne.s32.totalorder %s153, %s169
      %p171 = scmp.eq.s32.totalorder %s30, 0
      %p172 = por %p170, %p171
      %s173 = ssub.s32 %s24, %s31
      %p174 = scmp.eq.s32.totalorder %s173, 0
      %s176 = sadd.s32 %s175, 1
      %s177 = scalar_select %p174, %s175, %s176
      %p180 = pneg %p174
      %p181 = scmp.eq.s32.totalorder %s24, 1
      %p182 = por %p180, %p181
      %p183 = scmp.ne.s32.totalorder %s175, %s178
      %p184 = scmp.eq.s32.totalorder %s24, 0
      %p185 = por %p183, %p184
      %p186 = scmp.ne.s32.totalorder %s175, %s178
      %p187 = scmp.eq.s32.totalorder %s29, 1
      %p188 = por %p186, %p187
      %p189 = scmp.ne.s32.totalorder %s178, %s179
      %p190 = scmp.eq.s32.totalorder %s29, 0
      %p191 = por %p189, %p190
      %p192 = scmp.ne.s32.totalorder %s178, %s179
      %p193 = scmp.eq.s32.totalorder %s30, 1
      %p194 = por %p192, %p193
      %p196 = scmp.ne.s32.totalorder %s179, %s195
      %p197 = scmp.eq.s32.totalorder %s30, 0
      %p198 = por %p196, %p197
      %s199 = ssub.s32 %s24, %s31
      %p200 = scmp.eq.s32.totalorder %s199, 0
      %s202 = sadd.s32 %s201, 1
      %s203 = scalar_select %p200, %s201, %s202
      %p206 = pneg %p200
      %p207 = scmp.eq.s32.totalorder %s24, 1
      %p208 = por %p206, %p207
      %p209 = scmp.ne.s32.totalorder %s201, %s204
      %p210 = scmp.eq.s32.totalorder %s24, 0
      %p211 = por %p209, %p210
      %p212 = scmp.ne.s32.totalorder %s201, %s204
      %p213 = scmp.eq.s32.totalorder %s29, 1
      %p214 = por %p212, %p213
      %p215 = scmp.ne.s32.totalorder %s204, %s205
      %p216 = scmp.eq.s32.totalorder %s29, 0
      %p217 = por %p215, %p216
      %p218 = scmp.ne.s32.totalorder %s204, %s205
      %p219 = scmp.eq.s32.totalorder %s30, 1
      %p220 = por %p218, %p219
      %p222 = scmp.ne.s32.totalorder %s205, %s221
      %p223 = scmp.eq.s32.totalorder %s30, 0
      %p224 = por %p222, %p223
      %p225 = scmp.le.s32.totalorder 1, %s24
      %p226 = scmp.lt.s32.totalorder %s24, 3
      %p227 = pnand %p225, %p226
      %p228 = pneg %p227
      // Predicated region
      $region9: #{tpu_custom_call.1} parent=5 // pred_check
        _
      $region10: #{tpu_custom_call.1} parent=5 // pred_check_branch
        %230 = sbr.rel (%p227) target = $region12
      $region11: #{tpu_custom_call.1} parent=5 // pred_region
        %s231 = ssub.s32 %s24, 1
        // Predicated region
        $region13: #{tpu_custom_call.1} parent=11 // pred_check
          %p232 = pneg %p97
        $region14: #{tpu_custom_call.1} parent=11 // pred_check_branch
          %234 = sbr.rel (%p232) target = $region16
        $region15: #{tpu_custom_call.1} parent=11 // pred_region
          _
        $region16: #{tpu_custom_call.1} parent=11 // pred_fallthru
          _
        // Predicated region
        $region17: #{tpu_custom_call.1} parent=11 // pred_check
          %p235 = pneg %p118
        $region18: #{tpu_custom_call.1} parent=11 // pred_check_branch
          %237 = sbr.rel (%p235) target = $region20
        $region19: #{tpu_custom_call.1} parent=11 // pred_region
          %s239 = ssub.s32 512, 512
          %240 = vsyncadd [#allocation6], %s239
          %s241 = sshll.u32 [#allocation5], 4
          %s242 = int_to_ptr.vmem [resolvable:$true] %s241
          %247 = dma.hbm_to_vmem [thread:$0]  %s3, 512, %s242, [#allocation6], 128, 128, 8
        $region20: #{tpu_custom_call.1} parent=11 // pred_fallthru
          _
        // Predicated region
        $region21: #{tpu_custom_call.1} parent=11 // pred_check
          %p248 = pneg %p139
        $region22: #{tpu_custom_call.1} parent=11 // pred_check_branch
          %250 = sbr.rel (%p248) target = $region24
        $region23: #{tpu_custom_call.1} parent=11 // pred_region
          _
        $region24: #{tpu_custom_call.1} parent=11 // pred_fallthru
          _
      $region12: #{tpu_custom_call.1} parent=5 // pred_fallthru
        _
      %p251 = scmp.lt.s32.totalorder %s24, 2
      // Predicated region
      $region25: #{tpu_custom_call.1} parent=5 // pred_check
        %p252 = pneg %p251
      $region26: #{tpu_custom_call.1} parent=5 // pred_check_branch
        %254 = sbr.rel (%p252) target = $region28
      $region27: #{tpu_custom_call.1} parent=5 // pred_region
        // Predicated region
        $region29: #{tpu_custom_call.1} parent=27 // pred_check
          %p255 = pneg %p44
        $region30: #{tpu_custom_call.1} parent=27 // pred_check_branch
          %257 = sbr.rel (%p255) target = $region32
        $region31: #{tpu_custom_call.1} parent=27 // pred_region
          %p258 = scmp.lt.s32.totalorder %s24, 1
          %s259 = scalar_select %p258, %s24, 1
          %s260 = smul.addr %s259, 4
          %s261 = smul.addr %s260, 8
          %s262 = scalar_lea.vmem %s0, %s261
        $region32: #{tpu_custom_call.1} parent=27 // pred_fallthru
          _
        // Predicated region
        $region33: #{tpu_custom_call.1} parent=27 // pred_check
          %p263 = pneg %p70
        $region34: #{tpu_custom_call.1} parent=27 // pred_check_branch
          %265 = sbr.rel (%p263) target = $region36
        $region35: #{tpu_custom_call.1} parent=27 // pred_region
          %s266 = sand.u32 %s60, 1
          %s267 = scalar_lea.sflag [#allocation3], %s266
          %s268 = sand.u32 %s60, 1
          %s269 = smul.addr %s268, 32
          %s270 = scalar_lea.vmem [#allocation2], %s269
          %s272 = ssub.s32 512, 512
          %273 = vsyncadd %s267, %s272
          %s274 = smul.addr %s24, 4
          %s275 = smul.addr %s274, 128
          %s276 = scalar_lea.hbm %s1, %s275
          %s277 = sshll.u32 %s270, 4
          %s278 = int_to_ptr.vmem [resolvable:$true] %s277
          %283 = dma.hbm_to_vmem [thread:$0]  %s276, 512, %s278, %s267, 128, 128, 8
        $region36: #{tpu_custom_call.1} parent=27 // pred_fallthru
          _
      $region28: #{tpu_custom_call.1} parent=5 // pred_fallthru
        _
      %p284 = scmp.le.s32.totalorder 1, %s24
      %p285 = scmp.lt.s32.totalorder %s24, 3
      %p286 = pnand %p284, %p285
      %p287 = pneg %p286
      // Predicated region
      $region37: #{tpu_custom_call.1} parent=5 // pred_check
        _
      $region38: #{tpu_custom_call.1} parent=5 // pred_check_branch
        %289 = sbr.rel (%p286) target = $region40
      $region39: #{tpu_custom_call.1} parent=5 // pred_region
        %s290 = ssub.s32 %s24, 1
        %s291 = sand.u32 %s63, 1
        %s292 = scalar_lea.sflag [#allocation3], %s291
        %s293 = sand.u32 %s63, 1
        %s294 = smul.addr %s293, 32
        %s295 = scalar_lea.vmem [#allocation2], %s294
        // Predicated region
        $region41: #{tpu_custom_call.1} parent=39 // pred_check
          %p296 = pneg %p76
        $region42: #{tpu_custom_call.1} parent=39 // pred_check_branch
          %298 = sbr.rel (%p296) target = $region44
        $region43: #{tpu_custom_call.1} parent=39 // pred_region
          %299 = dma.done %s292, 512
        $region44: #{tpu_custom_call.1} parent=39 // pred_fallthru
          _
        // Predicated region
        $region45: #{tpu_custom_call.1} parent=39 // pred_check
          %p300 = pneg %p118
        $region46: #{tpu_custom_call.1} parent=39 // pred_check_branch
          %302 = sbr.rel (%p300) target = $region48
        $region47: #{tpu_custom_call.1} parent=39 // pred_region
          %303 = dma.done [#allocation6], 512
        $region48: #{tpu_custom_call.1} parent=39 // pred_fallthru
          _
        %p304 = scmp.lt.s32.totalorder %s29, 1
        %s305 = scalar_select %p304, %s29, 1
        %s306 = smul.addr %s305, 4
        %s307 = smul.addr %s306, 8
        %s308 = scalar_lea.vmem %s0, %s307
        %p309 = pneg %p50
        %p310 = pneg %p47
        %s311 = sand.u32 %s63, 1
        %s312 = scalar_lea.sflag [#allocation3], %s311
        %s313 = sand.u32 %s63, 1
        %s314 = smul.addr %s313, 32
        %s315 = scalar_lea.vmem [#allocation2], %s314
        %p316 = pneg %p76
        %p317 = pneg %p73
        %p318 = pneg %p97
        %p319 = pneg %p94
        %p320 = pneg %p118
        %p321 = pneg %p115
        %p322 = pneg %p139
        %p323 = pneg %p136
        %p324 = pneg %p165
        %p325 = pneg %p162
        %s326 = sand.u32 %s152, 1
        %s327 = scalar_lea.sflag [#allocation4], %s326
        %s328 = sand.u32 %s152, 1
        %s329 = smul.addr %s328, 32
        %s330 = scalar_lea.vmem [#allocation7], %s329
        %p331 = pneg %p191
        %p332 = pneg %p188
        %s333 = sand.u32 %s178, 1
        %s334 = scalar_lea.sflag [#allocation9], %s333
        %s335 = sand.u32 %s178, 1
        %s336 = smul.addr %s335, 32
        %s337 = scalar_lea.vmem [#allocation8], %s336
        %p338 = pneg %p217
        %p339 = pneg %p214
        %p340 = scmp.lt.s32.totalorder %s29, 1
        %s341 = scalar_select %p340, %s29, 1
        %s342 = smul.addr %s341, 4
        %s343 = smul.addr %s342, 8
        %s344 = scalar_lea.vmem %s7, %s343
        %p345 = scmp.lt.s32.totalorder %s29, 1
        %s346 = scalar_select %p345, %s29, 1
        %s347 = smul.addr %s346, 4
        %s348 = smul.addr %s347, 8
        %s349 = scalar_lea.vmem %s0, %s348
        %p350 = scmp.lt.s32.totalorder %s29, 1
        %s351 = scalar_select %p350, %s29, 1
        %s352 = smul.addr %s351, 4
        %s353 = smul.addr %s352, 8
        %s354 = scalar_lea.vmem %s7, %s353
        %v356 = vld [vmem:[%s349] sm:$0xff]
        %v357 = vld [vmem:[%s349 + $0x8] sm:$0xff]
        %v358 = vld [vmem:[%s349 + $0x10] sm:$0xff]
        %v359 = vld [vmem:[%s349 + $0x18] sm:$0xff]
        %v360 = vld [vmem:[%s295] sm:$0xff]
        %v361 = vld [vmem:[%s295 + $0x8] sm:$0xff]
        %v362 = vld [vmem:[%s295 + $0x10] sm:$0xff]
        %v363 = vld [vmem:[%s295 + $0x18] sm:$0xff]
        %v364 = vadd.f32 %v356, %v360
        %v365 = vadd.f32 %v357, %v361
        %v366 = vadd.f32 %v358, %v362
        %v367 = vadd.f32 %v359, %v363
        %368 = vst [vmem:[%s330] sm:$0xff] %v364
        %369 = vst [vmem:[%s330 + $0x8] sm:$0xff] %v365
        %370 = vst [vmem:[%s330 + $0x10] sm:$0xff] %v366
        %371 = vst [vmem:[%s330 + $0x18] sm:$0xff] %v367
        %v372 = vld [vmem:[%s2] sm:$0xff]
        %v373 = vld [vmem:[%s2 + $0x8] sm:$0xff]
        %v374 = vld [vmem:[%s2 + $0x10] sm:$0xff]
        %v375 = vld [vmem:[%s2 + $0x18] sm:$0xff]
        %v376 = vld [vmem:[%s2 + $0x20] sm:$0xff]
        %v377 = vpack.c.bf16 %v373, %v372
        %v378 = vpack.c.bf16 %v375, %v374
        %v379 = vpack.c.bf16 %v376, %v376
        %v380 = vpack.c.bf16 %v365, %v364
        %v381 = vpack.c.bf16 %v367, %v366
        %vm382 = vcmask 261120
        %v384 = vsel %vm382, %v377, 0
        %v387 = vsel %vm382, %v378, 0
        %v390 = vsel %vm382, %v379, 0
        %392 = vmatprep.subr.bf16.mxu0 0
        %393 = vmatpush1.bf16.msra.mxu0 %v380
        %394 = vmatprep.subr.bf16.mxu0 0
        %395 = vmatpush1.bf16.msra.mxu0 %v381
        %396 = vmatprep.subr.bf16.mxu0 0
        %397 = vmatpush1.bf16.msra.mxu0 0
        %398 = vmatprep.subr.bf16.mxu0 0
        %399 = vmatpush1.bf16.msra.mxu0 0
        %400 = vmatprep.subr.bf16.mxu0 0
        %401 = vmatpush1.bf16.msra.mxu0 0
        %402 = vmatprep.subr.bf16.mxu0 0
        %403 = vmatpush1.bf16.msra.mxu0 0
        %404 = vmatprep.subr.bf16.mxu0 0
        %405 = vmatpush1.bf16.msra.mxu0 0
        %406 = vmatprep.subr.bf16.mxu0 0
        %407 = vmatpush1.bf16.msra.mxu0 0
        %408 = vmatprep.subr.bf16.mxu0 0
        %409 = vmatpush1.bf16.msra.mxu0 0
        %410 = vmatprep.subr.bf16.mxu0 0
        %411 = vmatpush1.bf16.msra.mxu0 0
        %412 = vmatprep.subr.bf16.mxu0 0
        %413 = vmatpush1.bf16.msra.mxu0 0
        %414 = vmatprep.subr.bf16.mxu0 0
        %415 = vmatpush1.bf16.msra.mxu0 0
        %416 = vmatprep.subr.bf16.mxu0 0
        %417 = vmatpush1.bf16.msra.mxu0 0
        %418 = vmatprep.subr.bf16.mxu0 0
        %419 = vmatpush1.bf16.msra.mxu0 0
        %420 = vmatprep.subr.bf16.mxu0 0
        %421 = vmatpush1.bf16.msra.mxu0 0
        %422 = vmatprep.subr.bf16.mxu0 0
        %423 = vmatpush1.bf16.msra.mxu0 0
        %424 = vmatprep.mubr.bf16.mxu0 0
        %425 = vmatmul.mubr.bf16.gmra.mrb[0].mxu0 %v384
        %v426 = vpop.f32.mrb[0].mxu0
        %v427 = vadd.f32 0.0, %v426
        %v428 = vpop.f32.mrb[0].mxu0
        %v429 = vpop.f32.mrb[0].mxu0
        %v430 = vadd.f32 0.0, %v429
        %v431 = vpop.f32.mrb[0].mxu0
        %432 = vmatprep.mubr.bf16.mxu0 0
        %433 = vmatmul.mubr.bf16.gmra.mrb[0].mxu0 %v387
        %v434 = vpop.f32.mrb[0].mxu0
        %v435 = vadd.f32 0.0, %v434
        %v436 = vpop.f32.mrb[0].mxu0
        %v437 = vpop.f32.mrb[0].mxu0
        %v438 = vadd.f32 0.0, %v437
        %v439 = vpop.f32.mrb[0].mxu0
        %440 = vmatprep.mubr.bf16.mxu0 0
        %441 = vmatmul.mubr.bf16.gmra.mrb[0].mxu0 %v390
        %v442 = vpop.f32.mrb[0].mxu0
        %v443 = vadd.f32 0.0, %v442
        %v444 = vpop.f32.mrb[0].mxu0
        %v445 = vpop.f32.mrb[0].mxu0
        %v446 = vpop.f32.mrb[0].mxu0
        %447 = vdwg.mxu0
        %v448 = vld [vmem:[%s4] sm:$0xff]
        %v449 = vld [vmem:[%s4 + $0x8] sm:$0xff]
        %v450 = vld [vmem:[%s4 + $0x10] sm:$0xff]
        %v451 = vld [vmem:[%s4 + $0x18] sm:$0xff]
        %453 = vset.pattern.permute.xlu0 0
        %454 = vperm.xlu0 %453, %v448
        %v455 = vpop.permute.xlu0 %454
        %458 = vset.pattern.permute.xlu0 0
        %459 = vperm.xlu0 %458, %v449
        %v460 = vpop.permute.xlu0 %459
        %463 = vset.pattern.permute.xlu0 0
        %464 = vperm.xlu0 %463, %v450
        %v465 = vpop.permute.xlu0 %464
        %468 = vset.pattern.permute.xlu0 0
        %469 = vperm.xlu0 %468, %v451
        %v470 = vpop.permute.xlu0 %469
        %v472 = vadd.f32 %v430, %v455
        %v473 = vadd.f32 %v435, %v460
        %v474 = vadd.f32 %v438, %v465
        %v475 = vadd.f32 %v443, %v470
        %v476 = vpack.c.bf16 %v427, %v427
        %477 = vxpose.xlu0.c.b16.start [1/8] %v476, 128
        %478 = vxpose.xlu0.c.b16.cont [2/8] 0, 128
        %479 = vxpose.xlu0.c.b16.cont [3/8] 0, 128
        %480 = vxpose.xlu0.c.b16.cont [4/8] 0, 128
        %481 = vxpose.xlu0.c.b16.cont [5/8] 0, 128
        %482 = vxpose.xlu0.c.b16.cont [6/8] 0, 128
        %483 = vxpose.xlu0.c.b16.cont [7/8] 0, 128
        %484 = vxpose.xlu0.c.b16.end [8/8] 0, 128
        %v485 = vpop.trf.xlu0
        %v486 = vpop.trf.xlu0
        %v487 = vpop.trf.xlu0
        %v488 = vpop.trf.xlu0
        %v489 = vpop.trf.xlu0
        %v490 = vpop.trf.xlu0
        %v491 = vpop.trf.xlu0
        %v492 = vpop.trf.xlu0
        %vm493 = vcmask 64512
        %v495 = vsel %vm493, %v485, 0
        %v498 = vsel %vm493, %v486, 0
        %v501 = vsel %vm493, %v487, 0
        %v504 = vsel %vm493, %v488, 0
        %v507 = vsel %vm493, %v489, 0
        %v510 = vsel %vm493, %v490, 0
        %v513 = vsel %vm493, %v491, 0
        %v516 = vsel %vm493, %v492, 0
        %vm518 = vcmask 1043456
        %v520 = vsel %vm518, %v476, 0
        %522 = vmatprep.subr.bf16.mxu0 0
        %523 = vmatpush1.bf16.msra.mxu0 %v520
        %524 = vmatprep.subr.bf16.mxu0 0
        %525 = vmatpush1.bf16.msra.mxu0 0
        %526 = vmatprep.subr.bf16.mxu0 0
        %527 = vmatpush1.bf16.msra.mxu0 0
        %528 = vmatprep.subr.bf16.mxu0 0
        %529 = vmatpush1.bf16.msra.mxu0 0
        %530 = vmatprep.subr.bf16.mxu0 0
        %531 = vmatpush1.bf16.msra.mxu0 0
        %532 = vmatprep.subr.bf16.mxu0 0
        %533 = vmatpush1.bf16.msra.mxu0 0
        %534 = vmatprep.subr.bf16.mxu0 0
        %535 = vmatpush1.bf16.msra.mxu0 0
        %536 = vmatprep.subr.bf16.mxu0 0
        %537 = vmatpush1.bf16.msra.mxu0 0
        %538 = vmatprep.subr.bf16.mxu0 0
        %539 = vmatpush1.bf16.msra.mxu0 0
        %540 = vmatprep.subr.bf16.mxu0 0
        %541 = vmatpush1.bf16.msra.mxu0 0
        %542 = vmatprep.subr.bf16.mxu0 0
        %543 = vmatpush1.bf16.msra.mxu0 0
        %544 = vmatprep.subr.bf16.mxu0 0
        %545 = vmatpush1.bf16.msra.mxu0 0
        %546 = vmatprep.subr.bf16.mxu0 0
        %547 = vmatpush1.bf16.msra.mxu0 0
        %548 = vmatprep.subr.bf16.mxu0 0
        %549 = vmatpush1.bf16.msra.mxu0 0
        %550 = vmatprep.subr.bf16.mxu0 0
        %551 = vmatpush1.bf16.msra.mxu0 0
        %552 = vmatprep.subr.bf16.mxu0 0
        %553 = vmatpush1.bf16.msra.mxu0 0
        %554 = vmatprep.mubr.bf16.mxu0 0
        %555 = vmatmul.mubr.bf16.gmra.mrb[0].mxu0 %v495
        %v556 = vpop.f32.mrb[0].mxu0
        %v557 = vadd.f32 0.0, %v556
        %v558 = vpop.f32.mrb[0].mxu0
        %v559 = vpop.f32.mrb[0].mxu0
        %v560 = vadd.f32 0.0, %v559
        %v561 = vpop.f32.mrb[0].mxu0
        %562 = vmatprep.mubr.bf16.mxu0 0
        %563 = vmatmul.mubr.bf16.gmra.mrb[0].mxu0 %v498
        %v564 = vpop.f32.mrb[0].mxu0
        %v565 = vadd.f32 0.0, %v564
        %v566 = vpop.f32.mrb[0].mxu0
        %v567 = vpop.f32.mrb[0].mxu0
        %v568 = vadd.f32 0.0, %v567
        %v569 = vpop.f32.mrb[0].mxu0
        %570 = vmatprep.mubr.bf16.mxu0 0
        %571 = vmatmul.mubr.bf16.gmra.mrb[0].mxu0 %v501
        %v572 = vpop.f32.mrb[0].mxu0
        %v573 = vadd.f32 0.0, %v572
        %v574 = vpop.f32.mrb[0].mxu0
        %v575 = vpop.f32.mrb[0].mxu0
        %v576 = vadd.f32 0.0, %v575
        %v577 = vpop.f32.mrb[0].mxu0
        %578 = vmatprep.mubr.bf16.mxu0 0
        %579 = vmatmul.mubr.bf16.gmra.mrb[0].mxu0 %v504
        %v580 = vpop.f32.mrb[0].mxu0
        %v581 = vadd.f32 0.0, %v580
        %v582 = vpop.f32.mrb[0].mxu0
        %v583 = vpop.f32.mrb[0].mxu0
        %v584 = vadd.f32 0.0, %v583
        %v585 = vpop.f32.mrb[0].mxu0
        %586 = vmatprep.mubr.bf16.mxu0 0
        %587 = vmatmul.mubr.bf16.gmra.mrb[0].mxu0 %v507
        %v588 = vpop.f32.mrb[0].mxu0
        %v589 = vadd.f32 0.0, %v588
        %v590 = vpop.f32.mrb[0].mxu0
        %v591 = vpop.f32.mrb[0].mxu0
        %v592 = vadd.f32 0.0, %v591
        %v593 = vpop.f32.mrb[0].mxu0
        %594 = vmatprep.mubr.bf16.mxu0 0
        %595 = vmatmul.mubr.bf16.gmra.mrb[0].mxu0 %v510
        %v596 = vpop.f32.mrb[0].mxu0
        %v597 = vadd.f32 0.0, %v596
        %v598 = vpop.f32.mrb[0].mxu0
        %v599 = vpop.f32.mrb[0].mxu0
        %v600 = vadd.f32 0.0, %v599
        %v601 = vpop.f32.mrb[0].mxu0
        %602 = vmatprep.mubr.bf16.mxu0 0
        %603 = vmatmul.mubr.bf16.gmra.mrb[0].mxu0 %v513
        %v604 = vpop.f32.mrb[0].mxu0
        %v605 = vadd.f32 0.0, %v604
        %v606 = vpop.f32.mrb[0].mxu0
        %v607 = vpop.f32.mrb[0].mxu0
        %v608 = vadd.f32 0.0, %v607
        %v609 = vpop.f32.mrb[0].mxu0
        %610 = vmatprep.mubr.bf16.mxu0 0
        %611 = vmatmul.mubr.bf16.gmra.mrb[0].mxu0 %v516
        %v612 = vpop.f32.mrb[0].mxu0
        %v613 = vadd.f32 0.0, %v612
        %v614 = vpop.f32.mrb[0].mxu0
        %v615 = vpop.f32.mrb[0].mxu0
        %v616 = vadd.f32 0.0, %v615
        %v617 = vpop.f32.mrb[0].mxu0
        %618 = vdwg.mxu0
        %v619 = vlaneseq
        %v620 = vand.u32 %v619, 127
        %vm621 = vcmp.lt.s32.totalorder %v620, 16
        %v622 = vlaneseq
        %v623 = vshrl.u32 %v622, 7
        %v624 = vadd.s32 %v623, 8
        %v625 = vadd.s32 %v623, 16
        %v626 = vadd.s32 %v623, 24
        %v627 = vadd.s32 %v623, 32
        %v628 = vadd.s32 %v623, 40
        %v629 = vadd.s32 %v623, 48
        %v630 = vadd.s32 %v623, 56
        %v631 = vadd.s32 %v623, 64
        %v632 = vadd.s32 %v623, 72
        %v633 = vadd.s32 %v623, 80
        %v634 = vadd.s32 %v623, 88
        %v635 = vadd.s32 %v623, 96
        %v636 = vadd.s32 %v623, 104
        %v637 = vadd.s32 %v623, 112
        %v638 = vadd.s32 %v623, 120
        %vm639 = vcmp.lt.s32.totalorder %v623, 16
        %vm640 = vcmp.lt.s32.totalorder %v624, 16
        %vm641 = vcmp.lt.s32.totalorder %v625, 16
        %vm642 = vcmp.lt.s32.totalorder %v626, 16
        %vm643 = vcmp.lt.s32.totalorder %v627, 16
        %vm644 = vcmp.lt.s32.totalorder %v628, 16
        %vm645 = vcmp.lt.s32.totalorder %v629, 16
        %vm646 = vcmp.lt.s32.totalorder %v630, 16
        %vm647 = vcmp.lt.s32.totalorder %v631, 16
        %vm648 = vcmp.lt.s32.totalorder %v632, 16
        %vm649 = vcmp.lt.s32.totalorder %v633, 16
        %vm650 = vcmp.lt.s32.totalorder %v634, 16
        %vm651 = vcmp.lt.s32.totalorder %v635, 16
        %vm652 = vcmp.lt.s32.totalorder %v636, 16
        %vm653 = vcmp.lt.s32.totalorder %v637, 16
        %vm654 = vcmp.lt.s32.totalorder %v638, 16
        %v655 = vsel %vm621, 1, 0
        %vm656 = vcmp.eq.s32.totalorder %v655, 1
        %v657 = vsel %vm656, %v557, -1e+30
        %v658 = vsel %vm656, %v560, -1e+30
        %v659 = vsel %vm656, %v565, -1e+30
        %v660 = vsel %vm656, %v568, -1e+30
        %v661 = vsel %vm656, %v573, -1e+30
        %v662 = vsel %vm656, %v576, -1e+30
        %v663 = vsel %vm656, %v581, -1e+30
        %v664 = vsel %vm656, %v584, -1e+30
        %v665 = vsel %vm656, %v589, -1e+30
        %v666 = vsel %vm656, %v592, -1e+30
        %v667 = vsel %vm656, %v597, -1e+30
        %v668 = vsel %vm656, %v600, -1e+30
        %v669 = vsel %vm656, %v605, -1e+30
        %v670 = vsel %vm656, %v608, -1e+30
        %v671 = vsel %vm656, %v613, -1e+30
        %v672 = vsel %vm656, %v616, -1e+30
        %673 = vmax.xlane.f32.xlu0 %v657
        %v674 = vpop.xlane.xlu0 %673
        %675 = vmax.xlane.f32.xlu0 %v658
        %v676 = vpop.xlane.xlu0 %675
        %677 = vmax.xlane.f32.xlu0 %v659
        %v678 = vpop.xlane.xlu0 %677
        %679 = vmax.xlane.f32.xlu0 %v660
        %v680 = vpop.xlane.xlu0 %679
        %681 = vmax.xlane.f32.xlu0 %v661
        %v682 = vpop.xlane.xlu0 %681
        %683 = vmax.xlane.f32.xlu0 %v662
        %v684 = vpop.xlane.xlu0 %683
        %685 = vmax.xlane.f32.xlu0 %v663
        %v686 = vpop.xlane.xlu0 %685
        %687 = vmax.xlane.f32.xlu0 %v664
        %v688 = vpop.xlane.xlu0 %687
        %689 = vmax.xlane.f32.xlu0 %v665
        %v690 = vpop.xlane.xlu0 %689
        %691 = vmax.xlane.f32.xlu0 %v666
        %v692 = vpop.xlane.xlu0 %691
        %693 = vmax.xlane.f32.xlu0 %v667
        %v694 = vpop.xlane.xlu0 %693
        %695 = vmax.xlane.f32.xlu0 %v668
        %v696 = vpop.xlane.xlu0 %695
        %697 = vmax.xlane.f32.xlu0 %v669
        %v698 = vpop.xlane.xlu0 %697
        %699 = vmax.xlane.f32.xlu0 %v670
        %v700 = vpop.xlane.xlu0 %699
        %701 = vmax.xlane.f32.xlu0 %v671
        %v702 = vpop.xlane.xlu0 %701
        %703 = vmax.xlane.f32.xlu0 %v672
        %v704 = vpop.xlane.xlu0 %703
        %v705 = vsub.f32 %v657, %v674
        %v706 = vsub.f32 %v658, %v676
        %v707 = vsub.f32 %v659, %v678
        %v708 = vsub.f32 %v660, %v680
        %v709 = vsub.f32 %v661, %v682
        %v710 = vsub.f32 %v662, %v684
        %v711 = vsub.f32 %v663, %v686
        %v712 = vsub.f32 %v664, %v688
        %v713 = vsub.f32 %v665, %v690
        %v714 = vsub.f32 %v666, %v692
        %v715 = vsub.f32 %v667, %v694
        %v716 = vsub.f32 %v668, %v696
        %v717 = vsub.f32 %v669, %v698
        %v718 = vsub.f32 %v670, %v700
        %v719 = vsub.f32 %v671, %v702
        %v720 = vsub.f32 %v672, %v704
        %v721 = vmul.f32 %v705, 1.442695
        %v722 = vpow.pop %v721
        %v723 = vmul.f32 %v706, 1.442695
        %v724 = vpow.pop %v723
        %v725 = vmul.f32 %v707, 1.442695
        %v726 = vpow.pop %v725
        %v727 = vmul.f32 %v708, 1.442695
        %v728 = vpow.pop %v727
        %v729 = vmul.f32 %v709, 1.442695
        %v730 = vpow.pop %v729
        %v731 = vmul.f32 %v710, 1.442695
        %v732 = vpow.pop %v731
        %v733 = vmul.f32 %v711, 1.442695
        %v734 = vpow.pop %v733
        %v735 = vmul.f32 %v712, 1.442695
        %v736 = vpow.pop %v735
        %v737 = vmul.f32 %v713, 1.442695
        %v738 = vpow.pop %v737
        %v739 = vmul.f32 %v714, 1.442695
        %v740 = vpow.pop %v739
        %v741 = vmul.f32 %v715, 1.442695
        %v742 = vpow.pop %v741
        %v743 = vmul.f32 %v716, 1.442695
        %v744 = vpow.pop %v743
        %v745 = vmul.f32 %v717, 1.442695
        %v746 = vpow.pop %v745
        %v747 = vmul.f32 %v718, 1.442695
        %v748 = vpow.pop %v747
        %v749 = vmul.f32 %v719, 1.442695
        %v750 = vpow.pop %v749
        %v751 = vmul.f32 %v720, 1.442695
        %v752 = vpow.pop %v751
        %753 = vadd.xlane.f32.xlu0 %v722
        %v754 = vpop.xlane.xlu0 %753
        %755 = vadd.xlane.f32.xlu0 %v724
        %v756 = vpop.xlane.xlu0 %755
        %757 = vadd.xlane.f32.xlu0 %v726
        %v758 = vpop.xlane.xlu0 %757
        %759 = vadd.xlane.f32.xlu0 %v728
        %v760 = vpop.xlane.xlu0 %759
        %761 = vadd.xlane.f32.xlu0 %v730
        %v762 = vpop.xlane.xlu0 %761
        %763 = vadd.xlane.f32.xlu0 %v732
        %v764 = vpop.xlane.xlu0 %763
        %765 = vadd.xlane.f32.xlu0 %v734
        %v766 = vpop.xlane.xlu0 %765
        %767 = vadd.xlane.f32.xlu0 %v736
        %v768 = vpop.xlane.xlu0 %767
        %769 = vadd.xlane.f32.xlu0 %v738
        %v770 = vpop.xlane.xlu0 %769
        %771 = vadd.xlane.f32.xlu0 %v740
        %v772 = vpop.xlane.xlu0 %771
        %773 = vadd.xlane.f32.xlu0 %v742
        %v774 = vpop.xlane.xlu0 %773
        %775 = vadd.xlane.f32.xlu0 %v744
        %v776 = vpop.xlane.xlu0 %775
        %777 = vadd.xlane.f32.xlu0 %v746
        %v778 = vpop.xlane.xlu0 %777
        %779 = vadd.xlane.f32.xlu0 %v748
        %v780 = vpop.xlane.xlu0 %779
        %781 = vadd.xlane.f32.xlu0 %v750
        %v782 = vpop.xlane.xlu0 %781
        %783 = vadd.xlane.f32.xlu0 %v752
        %v784 = vpop.xlane.xlu0 %783
        %v785 = vrcp.pop %v754
        %v786 = vrcp.pop %v756
        %v787 = vrcp.pop %v758
        %v788 = vrcp.pop %v760
        %v789 = vrcp.pop %v762
        %v790 = vrcp.pop %v764
        %v791 = vrcp.pop %v766
        %v792 = vrcp.pop %v768
        %v793 = vrcp.pop %v770
        %v794 = vrcp.pop %v772
        %v795 = vrcp.pop %v774
        %v796 = vrcp.pop %v776
        %v797 = vrcp.pop %v778
        %v798 = vrcp.pop %v780
        %v799 = vrcp.pop %v782
        %v800 = vrcp.pop %v784
        %v801 = vmul.f32 %v722, %v785
        %v802 = vmul.f32 %v724, %v786
        %v803 = vmul.f32 %v726, %v787
        %v804 = vmul.f32 %v728, %v788
        %v805 = vmul.f32 %v730, %v789
        %v806 = vmul.f32 %v732, %v790
        %v807 = vmul.f32 %v734, %v791
        %v808 = vmul.f32 %v736, %v792
        %v809 = vmul.f32 %v738, %v793
        %v810 = vmul.f32 %v740, %v794
        %v811 = vmul.f32 %v742, %v795
        %v812 = vmul.f32 %v744, %v796
        %v813 = vmul.f32 %v746, %v797
        %v814 = vmul.f32 %v748, %v798
        %v815 = vmul.f32 %v750, %v799
        %v816 = vmul.f32 %v752, %v800
        %v817 = vsel %vm639, 1, 0
        %v818 = vsel %vm640, 1, 0
        %v819 = vsel %vm641, 1, 0
        %v820 = vsel %vm642, 1, 0
        %v821 = vsel %vm643, 1, 0
        %v822 = vsel %vm644, 1, 0
        %v823 = vsel %vm645, 1, 0
        %v824 = vsel %vm646, 1, 0
        %v825 = vsel %vm647, 1, 0
        %v826 = vsel %vm648, 1, 0
        %v827 = vsel %vm649, 1, 0
        %v828 = vsel %vm650, 1, 0
        %v829 = vsel %vm651, 1, 0
        %v830 = vsel %vm652, 1, 0
        %v831 = vsel %vm653, 1, 0
        %v832 = vsel %vm654, 1, 0
        %vm833 = vcmp.eq.s32.totalorder %v817, 1
        %vm834 = vcmp.eq.s32.totalorder %v818, 1
        %vm835 = vcmp.eq.s32.totalorder %v819, 1
        %vm836 = vcmp.eq.s32.totalorder %v820, 1
        %vm837 = vcmp.eq.s32.totalorder %v821, 1
        %vm838 = vcmp.eq.s32.totalorder %v822, 1
        %vm839 = vcmp.eq.s32.totalorder %v823, 1
        %vm840 = vcmp.eq.s32.totalorder %v824, 1
        %vm841 = vcmp.eq.s32.totalorder %v825, 1
        %vm842 = vcmp.eq.s32.totalorder %v826, 1
        %vm843 = vcmp.eq.s32.totalorder %v827, 1
        %vm844 = vcmp.eq.s32.totalorder %v828, 1
        %vm845 = vcmp.eq.s32.totalorder %v829, 1
        %vm846 = vcmp.eq.s32.totalorder %v830, 1
        %vm847 = vcmp.eq.s32.totalorder %v831, 1
        %vm848 = vcmp.eq.s32.totalorder %v832, 1
        %v849 = vsel %vm833, %v801, 0.0
        %v850 = vsel %vm834, %v802, 0.0
        %v851 = vsel %vm835, %v803, 0.0
        %v852 = vsel %vm836, %v804, 0.0
        %v853 = vsel %vm837, %v805, 0.0
        %v854 = vsel %vm838, %v806, 0.0
        %v855 = vsel %vm839, %v807, 0.0
        %v856 = vsel %vm840, %v808, 0.0
        %v857 = vsel %vm841, %v809, 0.0
        %v858 = vsel %vm842, %v810, 0.0
        %v859 = vsel %vm843, %v811, 0.0
        %v860 = vsel %vm844, %v812, 0.0
        %v861 = vsel %vm845, %v813, 0.0
        %v862 = vsel %vm846, %v814, 0.0
        %v863 = vsel %vm847, %v815, 0.0
        %v864 = vsel %vm848, %v816, 0.0
        %v865 = vadd.f32 %v849, %v850
        %v866 = vadd.f32 %v865, %v851
        %v867 = vadd.f32 %v866, %v852
        %v868 = vadd.f32 %v867, %v853
        %v869 = vadd.f32 %v868, %v854
        %v870 = vadd.f32 %v869, %v855
        %v871 = vadd.f32 %v870, %v856
        %v872 = vadd.f32 %v871, %v857
        %v873 = vadd.f32 %v872, %v858
        %v874 = vadd.f32 %v873, %v859
        %v875 = vadd.f32 %v874, %v860
        %v876 = vadd.f32 %v875, %v861
        %v877 = vadd.f32 %v876, %v862
        %v878 = vadd.f32 %v877, %v863
        %v879 = vadd.f32 %v878, %v864
        %v880 = vrot.slane %v879, 4
        %v881 = vadd.f32 %v879, %v880
        %v882 = vrot.slane %v881, 2
        %v883 = vadd.f32 %v881, %v882
        %v884 = vrot.slane %v883, 1
        %v885 = vadd.f32 %v883, %v884
        %v886 = vadd.f32 %v885, 1e-09
        %v887 = vrcp.pop %v886
        %v888 = vmul.f32 1.0, %v887
        %v889 = vmul.f32 %v849, %v888
        %v890 = vmul.f32 %v850, %v888
        %v891 = vmul.f32 %v851, %v888
        %v892 = vmul.f32 %v852, %v888
        %v893 = vmul.f32 %v853, %v888
        %v894 = vmul.f32 %v854, %v888
        %v895 = vmul.f32 %v855, %v888
        %v896 = vmul.f32 %v856, %v888
        %v897 = vmul.f32 %v857, %v888
        %v898 = vmul.f32 %v858, %v888
        %v899 = vmul.f32 %v859, %v888
        %v900 = vmul.f32 %v860, %v888
        %v901 = vmul.f32 %v861, %v888
        %v902 = vmul.f32 %v862, %v888
        %v903 = vmul.f32 %v863, %v888
        %v904 = vmul.f32 %v864, %v888
        %v905 = vpack.c.bf16 %v473, %v472
        %v906 = vpack.c.bf16 %v475, %v474
        %v907 = vpack.c.bf16 %v890, %v889
        %v908 = vpack.c.bf16 %v892, %v891
        %v909 = vpack.c.bf16 %v894, %v893
        %v910 = vpack.c.bf16 %v896, %v895
        %v911 = vpack.c.bf16 %v898, %v897
        %v912 = vpack.c.bf16 %v900, %v899
        %v913 = vpack.c.bf16 %v902, %v901
        %v914 = vpack.c.bf16 %v904, %v903
        %915 = vmatprep.subr.bf16.mxu0 0
        %916 = vmatpush1.bf16.msra.mxu0 %v907
        %917 = vmatprep.subr.bf16.mxu0 0
        %918 = vmatpush1.bf16.msra.mxu0 %v908
        %919 = vmatprep.subr.bf16.mxu0 0
        %920 = vmatpush1.bf16.msra.mxu0 %v909
        %921 = vmatprep.subr.bf16.mxu0 0
        %922 = vmatpush1.bf16.msra.mxu0 %v910
        %923 = vmatprep.subr.bf16.mxu0 0
        %924 = vmatpush1.bf16.msra.mxu0 %v911
        %925 = vmatprep.subr.bf16.mxu0 0
        %926 = vmatpush1.bf16.msra.mxu0 %v912
        %927 = vmatprep.subr.bf16.mxu0 0
        %928 = vmatpush1.bf16.msra.mxu0 %v913
        %929 = vmatprep.subr.bf16.mxu0 0
        %930 = vmatpush1.bf16.msra.mxu0 %v914
        %931 = vmatprep.subr.bf16.mxu0 0
        %932 = vmatpush1.bf16.msra.mxu0 0
        %933 = vmatprep.subr.bf16.mxu0 0
        %934 = vmatpush1.bf16.msra.mxu0 0
        %935 = vmatprep.subr.bf16.mxu0 0
        %936 = vmatpush1.bf16.msra.mxu0 0
        %937 = vmatprep.subr.bf16.mxu0 0
        %938 = vmatpush1.bf16.msra.mxu0 0
        %939 = vmatprep.subr.bf16.mxu0 0
        %940 = vmatpush1.bf16.msra.mxu0 0
        %941 = vmatprep.subr.bf16.mxu0 0
        %942 = vmatpush1.bf16.msra.mxu0 0
        %943 = vmatprep.subr.bf16.mxu0 0
        %944 = vmatpush1.bf16.msra.mxu0 0
        %945 = vmatprep.subr.bf16.mxu0 0
        %946 = vmatpush1.bf16.msra.mxu0 0
        %947 = vmatprep.mubr.bf16.mxu0 0
        %948 = vmatmul.mubr.bf16.gmra.mrb[0].mxu0 %v905
        %v949 = vpop.f32.mrb[0].mxu0
        %v950 = vadd.f32 0.0, %v949
        %v951 = vpop.f32.mrb[0].mxu0
        %v952 = vpop.f32.mrb[0].mxu0
        %v953 = vadd.f32 0.0, %v952
        %v954 = vpop.f32.mrb[0].mxu0
        %955 = vmatprep.mubr.bf16.mxu0 0
        %956 = vmatmul.mubr.bf16.gmra.mrb[0].mxu0 %v906
        %v957 = vpop.f32.mrb[0].mxu0
        %v958 = vadd.f32 0.0, %v957
        %v959 = vpop.f32.mrb[0].mxu0
        %v960 = vpop.f32.mrb[0].mxu0
        %v961 = vadd.f32 0.0, %v960
        %v962 = vpop.f32.mrb[0].mxu0
        %963 = vdwg.mxu0
        %v964 = vld [vmem:[#allocation5] sm:$0xff]
        %v965 = vld [vmem:[#allocation5 + $0x8] sm:$0xff]
        %v966 = vld [vmem:[#allocation5 + $0x10] sm:$0xff]
        %v967 = vld [vmem:[#allocation5 + $0x18] sm:$0xff]
        %v968 = vpack.c.bf16 %v965, %v964
        %v969 = vpack.c.bf16 %v967, %v966
        %v970 = vsub.f32 %v364, %v950
        %v971 = vsub.f32 %v365, %v953
        %v972 = vsub.f32 %v366, %v958
        %v973 = vsub.f32 %v367, %v961
        %v974 = vpack.c.bf16 %v971, %v970
        %v975 = vpack.c.bf16 %v973, %v972
        %976 = vset.pattern.permute.xlu0 1
        %977 = vperm.xlu0 %976, %v448
        %v978 = vpop.permute.xlu0 %977
        %980 = vset.pattern.permute.xlu0 1
        %981 = vperm.xlu0 %980, %v449
        %v982 = vpop.permute.xlu0 %981
        %984 = vset.pattern.permute.xlu0 1
        %985 = vperm.xlu0 %984, %v450
        %v986 = vpop.permute.xlu0 %985
        %988 = vset.pattern.permute.xlu0 1
        %989 = vperm.xlu0 %988, %v451
        %v990 = vpop.permute.xlu0 %989
        %v993 = vsel %vm382, %v968, 0
        %v996 = vsel %vm382, %v969, 0
        %998 = vmatprep.subr.bf16.mxu0 0
        %999 = vmatpush1.bf16.msra.mxu0 %v974
        %1000 = vmatprep.subr.bf16.mxu0 0
        %1001 = vmatpush1.bf16.msra.mxu0 %v975
        %1002 = vmatprep.subr.bf16.mxu0 0
        %1003 = vmatpush1.bf16.msra.mxu0 0
        %1004 = vmatprep.subr.bf16.mxu0 0
        %1005 = vmatpush1.bf16.msra.mxu0 0
        %1006 = vmatprep.subr.bf16.mxu0 0
        %1007 = vmatpush1.bf16.msra.mxu0 0
        %1008 = vmatprep.subr.bf16.mxu0 0
        %1009 = vmatpush1.bf16.msra.mxu0 0
        %1010 = vmatprep.subr.bf16.mxu0 0
        %1011 = vmatpush1.bf16.msra.mxu0 0
        %1012 = vmatprep.subr.bf16.mxu0 0
        %1013 = vmatpush1.bf16.msra.mxu0 0
        %1014 = vmatprep.subr.bf16.mxu0 0
        %1015 = vmatpush1.bf16.msra.mxu0 0
        %1016 = vmatprep.subr.bf16.mxu0 0
        %1017 = vmatpush1.bf16.msra.mxu0 0
        %1018 = vmatprep.subr.bf16.mxu0 0
        %1019 = vmatpush1.bf16.msra.mxu0 0
        %1020 = vmatprep.subr.bf16.mxu0 0
        %1021 = vmatpush1.bf16.msra.mxu0 0
        %1022 = vmatprep.subr.bf16.mxu0 0
        %1023 = vmatpush1.bf16.msra.mxu0 0
        %1024 = vmatprep.subr.bf16.mxu0 0
        %1025 = vmatpush1.bf16.msra.mxu0 0
        %1026 = vmatprep.subr.bf16.mxu0 0
        %1027 = vmatpush1.bf16.msra.mxu0 0
        %1028 = vmatprep.subr.bf16.mxu0 0
        %1029 = vmatpush1.bf16.msra.mxu0 0
        %1030 = vmatprep.mubr.bf16.mxu0 0
        %1031 = vmatmul.mubr.bf16.gmra.mrb[0].mxu0 %v993
        %v1032 = vpop.f32.mrb[0].mxu0
        %v1033 = vadd.f32 %v978, %v1032
        %v1034 = vpop.f32.mrb[0].mxu0
        %v1035 = vpop.f32.mrb[0].mxu0
        %v1036 = vadd.f32 %v982, %v1035
        %v1037 = vpop.f32.mrb[0].mxu0
        %1038 = vmatprep.mubr.bf16.mxu0 0
        %1039 = vmatmul.mubr.bf16.gmra.mrb[0].mxu0 %v996
        %v1040 = vpop.f32.mrb[0].mxu0
        %v1041 = vadd.f32 %v986, %v1040
        %v1042 = vpop.f32.mrb[0].mxu0
        %v1043 = vpop.f32.mrb[0].mxu0
        %v1044 = vadd.f32 %v990, %v1043
        %v1045 = vpop.f32.mrb[0].mxu0
        %1046 = vdwg.mxu0
        %1047 = vst [vmem:[%s337] sm:$0xff] %v1033
        %1048 = vst [vmem:[%s337 + $0x8] sm:$0xff] %v1036
        %1049 = vst [vmem:[%s337 + $0x10] sm:$0xff] %v1041
        %1050 = vst [vmem:[%s337 + $0x18] sm:$0xff] %v1044
        %v1051 = vsel %vm656, %v1033, 0.0
        %v1052 = vsel %vm656, %v1036, 0.0
        %v1053 = vsel %vm656, %v1041, 0.0
        %v1054 = vsel %vm656, %v1044, 0.0
        %1055 = vadd.xlane.f32.xlu0 %v1051
        %v1056 = vpop.xlane.xlu0 %1055
        %1057 = vadd.xlane.f32.xlu0 %v1052
        %v1058 = vpop.xlane.xlu0 %1057
        %1059 = vadd.xlane.f32.xlu0 %v1053
        %v1060 = vpop.xlane.xlu0 %1059
        %1061 = vadd.xlane.f32.xlu0 %v1054
        %v1062 = vpop.xlane.xlu0 %1061
        %vm1063 = vcmask 7168
        %1064 = vst.msk [vmem:[%s354] sm:$0xff] %vm1063, %v1056
        %1065 = vst.msk [vmem:[%s354 + $0x8] sm:$0xff] %vm1063, %v1058
        %1066 = vst.msk [vmem:[%s354 + $0x10] sm:$0xff] %vm1063, %v1060
        %1067 = vst.msk [vmem:[%s354 + $0x18] sm:$0xff] %vm1063, %v1062
        %v1068 = vmul.f32 %v1051, %v1051
        %v1069 = vmul.f32 %v1052, %v1052
        %v1070 = vmul.f32 %v1053, %v1053
        %v1071 = vmul.f32 %v1054, %v1054
        %1072 = vadd.xlane.f32.xlu0 %v1068
        %v1073 = vpop.xlane.xlu0 %1072
        %1074 = vadd.xlane.f32.xlu0 %v1069
        %v1075 = vpop.xlane.xlu0 %1074
        %1076 = vadd.xlane.f32.xlu0 %v1070
        %v1077 = vpop.xlane.xlu0 %1076
        %1078 = vadd.xlane.f32.xlu0 %v1071
        %v1079 = vpop.xlane.xlu0 %1078
        %vm1080 = vcmask 15368
        %1081 = vst.msk [vmem:[%s354] sm:$0xff] %vm1080, %v1073
        %1082 = vst.msk [vmem:[%s354 + $0x8] sm:$0xff] %vm1080, %v1075
        %1083 = vst.msk [vmem:[%s354 + $0x10] sm:$0xff] %vm1080, %v1077
        %1084 = vst.msk [vmem:[%s354 + $0x18] sm:$0xff] %vm1080, %v1079
        %s1085 = sand.u32 %s152, 1
        %s1086 = scalar_lea.sflag [#allocation4], %s1085
        %s1087 = sand.u32 %s152, 1
        %s1088 = smul.addr %s1087, 32
        %s1089 = scalar_lea.vmem [#allocation7], %s1088
        %s1090 = sand.u32 %s178, 1
        %s1091 = scalar_lea.sflag [#allocation9], %s1090
        %s1092 = sand.u32 %s178, 1
        %s1093 = smul.addr %s1092, 32
        %s1094 = scalar_lea.vmem [#allocation8], %s1093
        %p1095 = scmp.lt.s32.totalorder %s29, 1
        %s1096 = scalar_select %p1095, %s29, 1
        %s1097 = smul.addr %s1096, 4
        %s1098 = smul.addr %s1097, 8
        %s1099 = scalar_lea.vmem %s7, %s1098
        // Predicated region
        $region49: #{tpu_custom_call.1} parent=39 // pred_check
          %p1100 = pneg %p162
        $region50: #{tpu_custom_call.1} parent=39 // pred_check_branch
          %1102 = sbr.rel (%p1100) target = $region52
        $region51: #{tpu_custom_call.1} parent=39 // pred_region
          %s1104 = ssub.s32 512, 512
          %1105 = vsyncadd %s1086, %s1104
          %s1106 = smul.addr %s29, 4
          %s1107 = smul.addr %s1106, 128
          %s1108 = scalar_lea.hbm %s5, %s1107
          %s1109 = sshll.u32 %s1089, 4
          %s1110 = int_to_ptr.vmem [resolvable:$true] %s1109
          %1115 = dma.vmem_to_hbm [thread:$0]  %s1110, 512, %s1108, %s1086, 128, 128, 8
        $region52: #{tpu_custom_call.1} parent=39 // pred_fallthru
          _
        // Predicated region
        $region53: #{tpu_custom_call.1} parent=39 // pred_check
          %p1116 = pneg %p188
        $region54: #{tpu_custom_call.1} parent=39 // pred_check_branch
          %1118 = sbr.rel (%p1116) target = $region56
        $region55: #{tpu_custom_call.1} parent=39 // pred_region
          %s1120 = ssub.s32 512, 512
          %1121 = vsyncadd %s1091, %s1120
          %s1122 = smul.addr %s29, 4
          %s1123 = smul.addr %s1122, 128
          %s1124 = scalar_lea.hbm %s6, %s1123
          %s1125 = sshll.u32 %s1094, 4
          %s1126 = int_to_ptr.vmem [resolvable:$true] %s1125
          %1131 = dma.vmem_to_hbm [thread:$0]  %s1126, 512, %s1124, %s1091, 128, 128, 8
        $region56: #{tpu_custom_call.1} parent=39 // pred_fallthru
          _
        // Predicated region
        $region57: #{tpu_custom_call.1} parent=39 // pred_check
          %p1132 = pneg %p214
        $region58: #{tpu_custom_call.1} parent=39 // pred_check_branch
          %1134 = sbr.rel (%p1132) target = $region60
        $region59: #{tpu_custom_call.1} parent=39 // pred_region
          _
        $region60: #{tpu_custom_call.1} parent=39 // pred_fallthru
          _
      $region40: #{tpu_custom_call.1} parent=5 // pred_fallthru
        _
      %p1135 = scmp.le.s32.totalorder 2, %s24
      // Predicated region
      $region61: #{tpu_custom_call.1} parent=5 // pred_check
        %p1136 = pneg %p1135
      $region62: #{tpu_custom_call.1} parent=5 // pred_check_branch
        %1138 = sbr.rel (%p1136) target = $region64
      $region63: #{tpu_custom_call.1} parent=5 // pred_region
        %s1139 = ssub.s32 %s24, 2
        // Predicated region
        $region65: #{tpu_custom_call.1} parent=63 // pred_check
          %p1140 = pneg %p168
        $region66: #{tpu_custom_call.1} parent=63 // pred_check_branch
          %1142 = sbr.rel (%p1140) target = $region68
        $region67: #{tpu_custom_call.1} parent=63 // pred_region
          %s1143 = sand.u32 %s153, 1
          %s1144 = scalar_lea.sflag [#allocation4], %s1143
          %s1145 = sand.u32 %s153, 1
          %s1146 = smul.addr %s1145, 32
          %s1147 = scalar_lea.vmem [#allocation7], %s1146
          %1148 = dma.done %s1144, 512
        $region68: #{tpu_custom_call.1} parent=63 // pred_fallthru
          _
        // Predicated region
        $region69: #{tpu_custom_call.1} parent=63 // pred_check
          %p1149 = pneg %p194
        $region70: #{tpu_custom_call.1} parent=63 // pred_check_branch
          %1151 = sbr.rel (%p1149) target = $region72
        $region71: #{tpu_custom_call.1} parent=63 // pred_region
          %s1152 = sand.u32 %s179, 1
          %s1153 = scalar_lea.sflag [#allocation9], %s1152
          %s1154 = sand.u32 %s179, 1
          %s1155 = smul.addr %s1154, 32
          %s1156 = scalar_lea.vmem [#allocation8], %s1155
          %1157 = dma.done %s1153, 512
        $region72: #{tpu_custom_call.1} parent=63 // pred_fallthru
          _
        // Predicated region
        $region73: #{tpu_custom_call.1} parent=63 // pred_check
          %p1158 = pneg %p220
        $region74: #{tpu_custom_call.1} parent=63 // pred_check_branch
          %1160 = sbr.rel (%p1158) target = $region76
        $region75: #{tpu_custom_call.1} parent=63 // pred_region
          %p1161 = scmp.lt.s32.totalorder %s30, 1
          %s1162 = scalar_select %p1161, %s30, 1
          %s1163 = smul.addr %s1162, 4
          %s1164 = smul.addr %s1163, 8
          %s1165 = scalar_lea.vmem %s7, %s1164
        $region76: #{tpu_custom_call.1} parent=63 // pred_fallthru
          _
      $region64: #{tpu_custom_call.1} parent=5 // pred_fallthru
        _
    $region6: #{tpu_custom_call.1} parent=1 // loop_footer
      %s28 = sadd.s32 1, %s24
    $region7: #{tpu_custom_call.1} parent=1 // loop_footer_branch
      %23 = sbr.rel target = $region3
    $region8: #{tpu_custom_call.1} parent=1 // loop_exit
      _
    %1166 = vsyncpa [#allocation3], 1
    %s1167 = scalar_lea.sflag [#allocation3], 1
    %1168 = vsyncpa %s1167, 1
    %1169 = vsyncpa [#allocation6], 1
    %1170 = vsyncpa [#allocation4], 1
    %s1171 = scalar_lea.sflag [#allocation4], 1
    %1172 = vsyncpa %s1171, 1
    %1173 = vsyncpa [#allocation9], 1
    %s1174 = scalar_lea.sflag [#allocation9], 1
    %1175 = vsyncpa %s1174, 1

</llo_original>
